<compile_context>
chip_gen: v6e
topology: v6e:2x2x1
jax: 0.10.0
libtpu: 0.0.40
codegen_flags: <defaults>
</compile_context>

<pallas_src>
import functools

import jax
import jax.numpy as jnp
from jax import lax
from jax.experimental import pallas as pl
from jax.experimental.pallas import tpu as pltpu

IN_FEATURES = 4
OUT_FEATURES = 1
LRELU_SLOPE = 0.01        # nn.LeakyReLU default negative_slope

STRIP_ROWS = 512          # in-kernel strip: 512 rows x 128 lanes = 64K elems (256 KiB f32)
MAX_TILE_ROWS = 2048      # per-grid-step tile: 2048 rows x 128 lanes = 256K elems


def _round_up(x, m):
    return ((x + m - 1) // m) * m


def _pick_row_tile(rows):
    """Pick the per-grid-step tile height (in 128-lane rows) for `rows` total rows.

    Keeps the double-buffered (in + out) footprint at <= ~10 MiB (safe under v5e's
    16 MiB scoped-VMEM default and v7x's 64 MiB physical VMEM) and guarantees >= 2
    grid steps whenever rows >= 16 so v7x's two TensorCores both get work.
    """
    if rows < 16:
        return rows                      # single tiny block (full-dim block is legal)
    if rows >= 2 * MAX_TILE_ROWS:
        return MAX_TILE_ROWS             # many steps; deep pipeline
    half = -(-rows // 2)                 # ceil(rows / 2) -> at least 2 grid steps
    if half >= STRIP_ROWS:
        return min(_round_up(half, STRIP_ROWS), MAX_TILE_ROWS)
    return _round_up(half, 8)            # 8-sublane aligned


def dynamic_net_kernel(w_ref, b_ref, wf_ref, bf_ref, x_ref, o_ref, *, use_relu, slope):
    """One batch tile of the whole forward pass.

    w_ref  : SMEM (4, 4)            fused hidden weight (W0 @ W1 @ ... @ W_{L-1})
    b_ref  : SMEM (4,)              fused hidden bias
    wf_ref : SMEM (4,)              final-layer weight (flattened (4,1))
    bf_ref : SMEM (1,)              final-layer bias
    x_ref  : VMEM (4, tile_rows, 128)  input tile; feature-major, batch on sublanes+lanes
    o_ref  : VMEM (tile_rows, 128)     lane-dense output tile
    """
    tile_rows = x_ref.shape[1]
    strip = min(STRIP_ROWS, tile_rows)
    n_strips = tile_rows // strip        # exact by construction of _pick_row_tile

    def compute_strip(r0):
        # Dense (strip, 128) f32 feature slabs; cast from native dtype in-kernel.
        xs = [x_ref[f, pl.ds(r0, strip), :].astype(jnp.float32)
              for f in range(IN_FEATURES)]
        acc = None
        for j in range(IN_FEATURES):
            # Fused hidden layer, output feature j: VPU scalar*vector FMAs (no MXU).
            yj = xs[0] * w_ref[0, j]
            for f in range(1, IN_FEATURES):
                yj = yj + xs[f] * w_ref[f, j]
            yj = yj + b_ref[j]
            # Activation baked at trace time ('relu' / 'lrelu'), matching torch
            # exactly (including relu(-inf) == 0).
            if use_relu:
                yj = jnp.maximum(yj, 0.0)
            else:
                yj = jnp.where(yj > 0.0, yj, yj * slope)
            # Final 4->1 layer folded in as a VPU weighted sum into the output slab.
            t = yj * wf_ref[j]
            acc = t if acc is None else acc + t
        o_ref[pl.ds(r0, strip), :] = (acc + bf_ref[0]).astype(o_ref.dtype)

    if n_strips == 1:
        compute_strip(0)
    else:
        # Strip-mine to bound live VMEM temporaries (review item: short fori_loop
        # with unroll instead of one whole-tile expression).
        def body(s, carry):
            compute_strip(pl.multiple_of(s * strip, strip))
            return carry
        lax.fori_loop(0, n_strips, body, 0, unroll=True)


def dynamic_net_forward(x, w_stack, b_stack, w_final, b_final, act):
    """x: (B, 4); w_stack: (L, 4, 4); b_stack: (L, 4); w_final: (4, 1); b_final: (1,).
    act: 'relu' or 'lrelu' (Python-level selection, like the nn.ModuleDict lookup)."""
    if act not in ("relu", "lrelu"):
        raise KeyError(act)
    B = x.shape[0]

    # --- Precompose the purely-linear hidden stack into one (4,4) weight + (4,) bias:
    #     ((x@W0+b0)@W1+b1)... == x @ (W0@W1@...) + folded bias.
    hi = lax.Precision.HIGHEST
    w_fused = jnp.eye(IN_FEATURES, dtype=jnp.float32)
    b_fused = jnp.zeros((IN_FEATURES,), dtype=jnp.float32)
    for i in range(w_stack.shape[0]):
        wi = w_stack[i].astype(jnp.float32)
        b_fused = jnp.dot(b_fused, wi, precision=hi) + b_stack[i].astype(jnp.float32)
        w_fused = jnp.dot(w_fused, wi, precision=hi)
    wf = w_final.reshape(IN_FEATURES).astype(jnp.float32)
    bf = b_final.reshape(OUT_FEATURES).astype(jnp.float32)

    # --- Tiling: pad the batch up to a multiple of the chosen 128-lane tile so the
    #     grid divides exactly (no whole-array fallback block); padded rows are
    #     computed on zeros and sliced off at the end.
    rows = pl.cdiv(max(B, 1), 128)
    tile_rows = _pick_row_tile(rows)
    rows_pad = _round_up(rows, tile_rows)
    b_pad = rows_pad * 128
    xp = x if b_pad == B else jnp.pad(x, ((0, b_pad - B), (0, 0)))
    num_blocks = rows_pad // tile_rows

    # Feature-major layout (batch on sublanes + lanes). Native dtype is kept; the
    # reshape after .T is free (row-major).  allow_input_fusion lets XLA fuse this
    # transpose into the pallas_call operand instead of materializing it in HBM.
    x_t = xp.T.reshape(IN_FEATURES, rows_pad, 128)

    out = pl.pallas_call(
        functools.partial(dynamic_net_kernel,
                          use_relu=(act == "relu"), slope=LRELU_SLOPE),
        out_shape=jax.ShapeDtypeStruct((rows_pad, 128), jnp.float32),
        grid=(num_blocks,),
        in_specs=[
            pl.BlockSpec(memory_space=pltpu.SMEM),   # fused hidden weight (4,4)
            pl.BlockSpec(memory_space=pltpu.SMEM),   # fused hidden bias (4,)
            pl.BlockSpec(memory_space=pltpu.SMEM),   # final weight (4,)
            pl.BlockSpec(memory_space=pltpu.SMEM),   # final bias (1,)
            pl.BlockSpec((IN_FEATURES, tile_rows, 128), lambda i: (0, i, 0)),  # x tile
        ],
        out_specs=pl.BlockSpec((tile_rows, 128), lambda i: (i, 0)),
        compiler_params=pltpu.CompilerParams(
            dimension_semantics=("parallel",),          # megacore sharding on v7x
            vmem_limit_bytes=32 * 1024 * 1024,          # explicit budget (v5e default=16M)
            allow_input_fusion=[False, False, False, False, True],
        ),
    )(w_fused, b_fused, wf, bf, x_t)

    # (rows_pad,128) -> (b_pad,1) is a free row-major reshape; drop the padded tail.
    return out.reshape(b_pad, OUT_FEATURES)[:B]


def reference_forward(x, w_stack, b_stack, w_final, b_final, act):
    """Faithful sequential reference (matches the PyTorch module)."""
    hi = lax.Precision.HIGHEST
    y = x.astype(jnp.float32)
    for i in range(w_stack.shape[0]):
        y = jnp.dot(y, w_stack[i], precision=hi) + b_stack[i]
    y = jnp.maximum(y, 0.0) if act == "relu" else jnp.where(y > 0, y, LRELU_SLOPE * y)
    return jnp.dot(y, w_final, precision=hi) + b_final


if __name__ == "__main__":
    key = jax.random.PRNGKey(0)
    k_x, k_w, k_b, k_wf, k_bf = jax.random.split(key, 5)

    NUM_LAYERS = 3
    # Deterministic "torch.randn"-style parameter init.
    w_stack = jax.random.normal(k_w, (NUM_LAYERS, IN_FEATURES, IN_FEATURES), jnp.float32)
    b_stack = jax.random.normal(k_b, (NUM_LAYERS, IN_FEATURES), jnp.float32)
    w_final = jax.random.normal(k_wf, (IN_FEATURES, OUT_FEATURES), jnp.float32)
    b_final = jax.random.normal(k_bf, (OUT_FEATURES,), jnp.float32)

    ok = True
    # 8: tiny single-block case; 256: aligned single block; 2500: padding + 2-step grid.
    for B in (8, 256, 2500):
        x = jax.random.normal(jax.random.fold_in(k_x, B), (B, IN_FEATURES), jnp.float32)
        for act_name in ("relu", "lrelu"):
            out = dynamic_net_forward(x, w_stack, b_stack, w_final, b_final, act_name)
            out = jax.block_until_ready(out)
            ref = reference_forward(x, w_stack, b_stack, w_final, b_final, act_name)
            if out.shape != ref.shape or not bool(
                    jnp.allclose(out, ref, atol=1e-4, rtol=1e-4)):
                ok = False

    if ok:
        print("KERNEL_OK")
</pallas_src>

<mosaic_0001>
module attributes {stable_mosaic.version = 11 : i64} {
  func.func @dynamic_net_kernel(%arg0: i32, %arg1: memref<4x4xf32, #tpu.memory_space<smem>>, %arg2: memref<4xf32, #tpu.memory_space<smem>>, %arg3: memref<4xf32, #tpu.memory_space<smem>>, %arg4: memref<1xf32, #tpu.memory_space<smem>>, %arg5: memref<4x1x128xf32, #tpu.memory_space<vmem>>, %arg6: memref<1x128xf32, #tpu.memory_space<vmem>>) attributes {dimension_semantics = [#tpu.dimension_semantics<parallel>], iteration_bounds = array<i64: 1>, scalar_prefetch = 0 : i64, scratch_operands = 0 : i64, tpu.core_type = #tpu.core_type<tc>, window_params = [{transform_indices = @transform_0, window_bounds = array<i64: 4, 4>}, {transform_indices = @transform_1, window_bounds = array<i64: 4>}, {transform_indices = @transform_2, window_bounds = array<i64: 4>}, {transform_indices = @transform_3, window_bounds = array<i64: 1>}, {transform_indices = @transform_4, window_bounds = array<i64: 4, 1, 128>}, {transform_indices = @transform_5, window_bounds = array<i64: 1, 128>}]} {
    %c0 = arith.constant 0 : index
    %c0_0 = arith.constant 0 : index
    %c0_1 = arith.constant 0 : index
    %0 = vector.load %arg5[%c0, %c0_0, %c0_1] : memref<4x1x128xf32, #tpu.memory_space<vmem>>, vector<1x1x128xf32>
    %1 = vector.shape_cast %0 : vector<1x1x128xf32> to vector<1x128xf32>
    %c1 = arith.constant 1 : index
    %c0_2 = arith.constant 0 : index
    %c0_3 = arith.constant 0 : index
    %2 = vector.load %arg5[%c1, %c0_2, %c0_3] : memref<4x1x128xf32, #tpu.memory_space<vmem>>, vector<1x1x128xf32>
    %3 = vector.shape_cast %2 : vector<1x1x128xf32> to vector<1x128xf32>
    %c2 = arith.constant 2 : index
    %c0_4 = arith.constant 0 : index
    %c0_5 = arith.constant 0 : index
    %4 = vector.load %arg5[%c2, %c0_4, %c0_5] : memref<4x1x128xf32, #tpu.memory_space<vmem>>, vector<1x1x128xf32>
    %5 = vector.shape_cast %4 : vector<1x1x128xf32> to vector<1x128xf32>
    %c3 = arith.constant 3 : index
    %c0_6 = arith.constant 0 : index
    %c0_7 = arith.constant 0 : index
    %6 = vector.load %arg5[%c3, %c0_6, %c0_7] : memref<4x1x128xf32, #tpu.memory_space<vmem>>, vector<1x1x128xf32>
    %7 = vector.shape_cast %6 : vector<1x1x128xf32> to vector<1x128xf32>
    %c0_8 = arith.constant 0 : index
    %c0_9 = arith.constant 0 : index
    %8 = memref.load %arg1[%c0_8, %c0_9] : memref<4x4xf32, #tpu.memory_space<smem>>
    %9 = vector.broadcast %8 : f32 to vector<1x128xf32>
    %10 = arith.mulf %1, %9 : vector<1x128xf32>
    %c1_10 = arith.constant 1 : index
    %c0_11 = arith.constant 0 : index
    %11 = memref.load %arg1[%c1_10, %c0_11] : memref<4x4xf32, #tpu.memory_space<smem>>
    %12 = vector.broadcast %11 : f32 to vector<1x128xf32>
    %13 = arith.mulf %3, %12 : vector<1x128xf32>
    %14 = arith.addf %10, %13 : vector<1x128xf32>
    %c2_12 = arith.constant 2 : index
    %c0_13 = arith.constant 0 : index
    %15 = memref.load %arg1[%c2_12, %c0_13] : memref<4x4xf32, #tpu.memory_space<smem>>
    %16 = vector.broadcast %15 : f32 to vector<1x128xf32>
    %17 = arith.mulf %5, %16 : vector<1x128xf32>
    %18 = arith.addf %14, %17 : vector<1x128xf32>
    %c3_14 = arith.constant 3 : index
    %c0_15 = arith.constant 0 : index
    %19 = memref.load %arg1[%c3_14, %c0_15] : memref<4x4xf32, #tpu.memory_space<smem>>
    %20 = vector.broadcast %19 : f32 to vector<1x128xf32>
    %21 = arith.mulf %7, %20 : vector<1x128xf32>
    %22 = arith.addf %18, %21 : vector<1x128xf32>
    %c0_16 = arith.constant 0 : index
    %23 = memref.load %arg2[%c0_16] : memref<4xf32, #tpu.memory_space<smem>>
    %24 = vector.broadcast %23 : f32 to vector<1x128xf32>
    %25 = arith.addf %22, %24 : vector<1x128xf32>
    %cst = arith.constant 0.000000e+00 : f32
    %26 = vector.broadcast %cst : f32 to vector<1x128xf32>
    %27 = arith.maximumf %25, %26 : vector<1x128xf32>
    %c0_17 = arith.constant 0 : index
    %28 = memref.load %arg3[%c0_17] : memref<4xf32, #tpu.memory_space<smem>>
    %29 = vector.broadcast %28 : f32 to vector<1x128xf32>
    %30 = arith.mulf %27, %29 : vector<1x128xf32>
    %c0_18 = arith.constant 0 : index
    %c1_19 = arith.constant 1 : index
    %31 = memref.load %arg1[%c0_18, %c1_19] : memref<4x4xf32, #tpu.memory_space<smem>>
    %32 = vector.broadcast %31 : f32 to vector<1x128xf32>
    %33 = arith.mulf %1, %32 : vector<1x128xf32>
    %c1_20 = arith.constant 1 : index
    %c1_21 = arith.constant 1 : index
    %34 = memref.load %arg1[%c1_20, %c1_21] : memref<4x4xf32, #tpu.memory_space<smem>>
    %35 = vector.broadcast %34 : f32 to vector<1x128xf32>
    %36 = arith.mulf %3, %35 : vector<1x128xf32>
    %37 = arith.addf %33, %36 : vector<1x128xf32>
    %c2_22 = arith.constant 2 : index
    %c1_23 = arith.constant 1 : index
    %38 = memref.load %arg1[%c2_22, %c1_23] : memref<4x4xf32, #tpu.memory_space<smem>>
    %39 = vector.broadcast %38 : f32 to vector<1x128xf32>
    %40 = arith.mulf %5, %39 : vector<1x128xf32>
    %41 = arith.addf %37, %40 : vector<1x128xf32>
    %c3_24 = arith.constant 3 : index
    %c1_25 = arith.constant 1 : index
    %42 = memref.load %arg1[%c3_24, %c1_25] : memref<4x4xf32, #tpu.memory_space<smem>>
    %43 = vector.broadcast %42 : f32 to vector<1x128xf32>
    %44 = arith.mulf %7, %43 : vector<1x128xf32>
    %45 = arith.addf %41, %44 : vector<1x128xf32>
    %c1_26 = arith.constant 1 : index
    %46 = memref.load %arg2[%c1_26] : memref<4xf32, #tpu.memory_space<smem>>
    %47 = vector.broadcast %46 : f32 to vector<1x128xf32>
    %48 = arith.addf %45, %47 : vector<1x128xf32>
    %cst_27 = arith.constant 0.000000e+00 : f32
    %49 = vector.broadcast %cst_27 : f32 to vector<1x128xf32>
    %50 = arith.maximumf %48, %49 : vector<1x128xf32>
    %c1_28 = arith.constant 1 : index
    %51 = memref.load %arg3[%c1_28] : memref<4xf32, #tpu.memory_space<smem>>
    %52 = vector.broadcast %51 : f32 to vector<1x128xf32>
    %53 = arith.mulf %50, %52 : vector<1x128xf32>
    %54 = arith.addf %30, %53 : vector<1x128xf32>
    %c0_29 = arith.constant 0 : index
    %c2_30 = arith.constant 2 : index
    %55 = memref.load %arg1[%c0_29, %c2_30] : memref<4x4xf32, #tpu.memory_space<smem>>
    %56 = vector.broadcast %55 : f32 to vector<1x128xf32>
    %57 = arith.mulf %1, %56 : vector<1x128xf32>
    %c1_31 = arith.constant 1 : index
    %c2_32 = arith.constant 2 : index
    %58 = memref.load %arg1[%c1_31, %c2_32] : memref<4x4xf32, #tpu.memory_space<smem>>
    %59 = vector.broadcast %58 : f32 to vector<1x128xf32>
    %60 = arith.mulf %3, %59 : vector<1x128xf32>
    %61 = arith.addf %57, %60 : vector<1x128xf32>
    %c2_33 = arith.constant 2 : index
    %c2_34 = arith.constant 2 : index
    %62 = memref.load %arg1[%c2_33, %c2_34] : memref<4x4xf32, #tpu.memory_space<smem>>
    %63 = vector.broadcast %62 : f32 to vector<1x128xf32>
    %64 = arith.mulf %5, %63 : vector<1x128xf32>
    %65 = arith.addf %61, %64 : vector<1x128xf32>
    %c3_35 = arith.constant 3 : index
    %c2_36 = arith.constant 2 : index
    %66 = memref.load %arg1[%c3_35, %c2_36] : memref<4x4xf32, #tpu.memory_space<smem>>
    %67 = vector.broadcast %66 : f32 to vector<1x128xf32>
    %68 = arith.mulf %7, %67 : vector<1x128xf32>
    %69 = arith.addf %65, %68 : vector<1x128xf32>
    %c2_37 = arith.constant 2 : index
    %70 = memref.load %arg2[%c2_37] : memref<4xf32, #tpu.memory_space<smem>>
    %71 = vector.broadcast %70 : f32 to vector<1x128xf32>
    %72 = arith.addf %69, %71 : vector<1x128xf32>
    %cst_38 = arith.constant 0.000000e+00 : f32
    %73 = vector.broadcast %cst_38 : f32 to vector<1x128xf32>
    %74 = arith.maximumf %72, %73 : vector<1x128xf32>
    %c2_39 = arith.constant 2 : index
    %75 = memref.load %arg3[%c2_39] : memref<4xf32, #tpu.memory_space<smem>>
    %76 = vector.broadcast %75 : f32 to vector<1x128xf32>
    %77 = arith.mulf %74, %76 : vector<1x128xf32>
    %78 = arith.addf %54, %77 : vector<1x128xf32>
    %c0_40 = arith.constant 0 : index
    %c3_41 = arith.constant 3 : index
    %79 = memref.load %arg1[%c0_40, %c3_41] : memref<4x4xf32, #tpu.memory_space<smem>>
    %80 = vector.broadcast %79 : f32 to vector<1x128xf32>
    %81 = arith.mulf %1, %80 : vector<1x128xf32>
    %c1_42 = arith.constant 1 : index
    %c3_43 = arith.constant 3 : index
    %82 = memref.load %arg1[%c1_42, %c3_43] : memref<4x4xf32, #tpu.memory_space<smem>>
    %83 = vector.broadcast %82 : f32 to vector<1x128xf32>
    %84 = arith.mulf %3, %83 : vector<1x128xf32>
    %85 = arith.addf %81, %84 : vector<1x128xf32>
    %c2_44 = arith.constant 2 : index
    %c3_45 = arith.constant 3 : index
    %86 = memref.load %arg1[%c2_44, %c3_45] : memref<4x4xf32, #tpu.memory_space<smem>>
    %87 = vector.broadcast %86 : f32 to vector<1x128xf32>
    %88 = arith.mulf %5, %87 : vector<1x128xf32>
    %89 = arith.addf %85, %88 : vector<1x128xf32>
    %c3_46 = arith.constant 3 : index
    %c3_47 = arith.constant 3 : index
    %90 = memref.load %arg1[%c3_46, %c3_47] : memref<4x4xf32, #tpu.memory_space<smem>>
    %91 = vector.broadcast %90 : f32 to vector<1x128xf32>
    %92 = arith.mulf %7, %91 : vector<1x128xf32>
    %93 = arith.addf %89, %92 : vector<1x128xf32>
    %c3_48 = arith.constant 3 : index
    %94 = memref.load %arg2[%c3_48] : memref<4xf32, #tpu.memory_space<smem>>
    %95 = vector.broadcast %94 : f32 to vector<1x128xf32>
    %96 = arith.addf %93, %95 : vector<1x128xf32>
    %cst_49 = arith.constant 0.000000e+00 : f32
    %97 = vector.broadcast %cst_49 : f32 to vector<1x128xf32>
    %98 = arith.maximumf %96, %97 : vector<1x128xf32>
    %c3_50 = arith.constant 3 : index
    %99 = memref.load %arg3[%c3_50] : memref<4xf32, #tpu.memory_space<smem>>
    %100 = vector.broadcast %99 : f32 to vector<1x128xf32>
    %101 = arith.mulf %98, %100 : vector<1x128xf32>
    %102 = arith.addf %78, %101 : vector<1x128xf32>
    %c0_51 = arith.constant 0 : index
    %103 = memref.load %arg4[%c0_51] : memref<1xf32, #tpu.memory_space<smem>>
    %104 = vector.broadcast %103 : f32 to vector<1x128xf32>
    %105 = arith.addf %102, %104 : vector<1x128xf32>
    %c0_52 = arith.constant 0 : index
    %c0_53 = arith.constant 0 : index
    %106 = vector.load %arg6[%c0_52, %c0_53] : memref<1x128xf32, #tpu.memory_space<vmem>>, vector<1x128xf32>
    tpu.vector_store %arg6[%c0_52, %c0_53], %105 {strides = array<i32>} : memref<1x128xf32, #tpu.memory_space<vmem>>, vector<1x128xf32>,
    return
  }
  func.func @transform_0(%arg0: i32) -> (i32, i32) {
    %c0_i32 = arith.constant 0 : i32
    %c0_i32_0 = arith.constant 0 : i32
    %c0_i32_1 = arith.constant 0 : i32
    return %c0_i32, %c0_i32_0 : i32, i32
  }
  func.func @transform_1(%arg0: i32) -> i32 {
    %c0_i32 = arith.constant 0 : i32
    %c0_i32_0 = arith.constant 0 : i32
    return %c0_i32 : i32
  }
  func.func @transform_2(%arg0: i32) -> i32 {
    %c0_i32 = arith.constant 0 : i32
    %c0_i32_0 = arith.constant 0 : i32
    return %c0_i32 : i32
  }
  func.func @transform_3(%arg0: i32) -> i32 {
    %c0_i32 = arith.constant 0 : i32
    %c0_i32_0 = arith.constant 0 : i32
    return %c0_i32 : i32
  }
  func.func @transform_4(%arg0: i32) -> (i32, i32, i32) {
    %c0_i32 = arith.constant 0 : i32
    %c0_i32_0 = arith.constant 0 : i32
    %c0_i32_1 = arith.constant 0 : i32
    return %c0_i32, %arg0, %c0_i32_0 : i32, i32, i32
  }
  func.func @transform_5(%arg0: i32) -> (i32, i32) {
    %c0_i32 = arith.constant 0 : i32
    %c0_i32_0 = arith.constant 0 : i32
    return %arg0, %c0_i32 : i32, i32
  }
}

</mosaic_0001>

<llo_original>
// kernel: tpu_custom_call.1
$region0: #{tpu_custom_call.1}
  #allocation0 [shape = 'u32[]', space=smem, size = 0x4, offset = 0x4, fixed_abs, tag = 'smem constant byte address 0x4 - core index']
  #allocation1 [shape = 'u32[144,128]{1,0:T(1,128)}', space=vmem, size = 0x12000, scoped, tag = 'internal scratch']
  #allocation2 [shape = 'f32[1]{0:T(128)S(6)}', space=smem, size = 0x200, scoped, tag = 'scoped memory for tpu_custom_call.1']
  %s0 = inlined_call_operand.hbm [shape: f32[4,4], index: 0, kind: input, shape index: {}]
  %s1 = inlined_call_operand.vmem [shape: f32[4], index: 1, kind: input, shape index: {}]
  %s2 = inlined_call_operand.vmem [shape: f32[4], index: 2, kind: input, shape index: {}]
  %s3 = inlined_call_operand.<no memory space> [shape: f32[1], index: 3, kind: input, shape index: {}]
  %s4 = inlined_call_operand.vmem [shape: f32[4,1,128], index: 4, kind: input, shape index: {}]
  %s5 = inlined_call_operand.hbm [shape: f32[1,128], index: 5, kind: output, shape index: {}]
  %s6 = sld [smem:[#allocation0]]
  $region42: #{tpu_custom_call.1} parent=0
    _
  %s8 = ssub.s32 1, %s6
  %s9 = scalar_select 0, %s8, %s6
  %10 = sst [smem:[#allocation2]] %s3
  $region1: #{tpu_custom_call.1} parent=0
    #allocation3 [shape = 'u8[2048]{0}', space=smem, size = 0x800, scoped, tag = 'input window, operand 0, single buffered']
    #allocation4 [shape = 's32[1]{0}', space=sflag, size = 0x4, scoped, tag = 'scoped memory for tpu_custom_call.1']
    #allocation5 [shape = 's32[1]{0}', space=sflag, size = 0x4, scoped, tag = 'scoped memory for tpu_custom_call.1']
    #allocation6 [shape = 's32[1]{0}', space=sflag, size = 0x4, scoped, tag = 'scoped memory for tpu_custom_call.1']
    #allocation7 [shape = 'u8[512]{0}', space=smem, size = 0x200, scoped, tag = 'input window, operand 1, single buffered']
    #allocation8 [shape = 'u8[512]{0}', space=smem, size = 0x200, scoped, tag = 'input window, operand 2, single buffered']
    #allocation9 [shape = 's32[1]{0}', space=sflag, size = 0x4, scoped, tag = 'scoped memory for tpu_custom_call.1']
    #allocation10 [shape = 'u8[512]{0}', space=vmem, size = 0x400, scoped, tag = 'output window, operand 0, single buffered']
    %11 = vsyncpa [#allocation5], 0
    %12 = vsyncpa [#allocation6], 0
    %13 = vsyncpa [#allocation9], 0
    %14 = vsyncpa [#allocation4], 0
    // Predicated region
    $region2: #{tpu_custom_call.1} parent=1 // pred_check
      _
    $region3: #{tpu_custom_call.1} parent=1 // pred_check_branch
      %16 = sbr.rel (0) target = $region5
    $region4: #{tpu_custom_call.1} parent=1 // pred_region
      %s18 = ssub.s32 64, 64
      %19 = vsyncadd [#allocation5], %s18
      %22 = dma.hbm_to_smem %s0, 64, [#allocation3], [#allocation5]
    $region5: #{tpu_custom_call.1} parent=1 // pred_fallthru
      _
    // Predicated region
    $region6: #{tpu_custom_call.1} parent=1 // pred_check
      _
    $region7: #{tpu_custom_call.1} parent=1 // pred_check_branch
      %24 = sbr.rel (0) target = $region9
    $region8: #{tpu_custom_call.1} parent=1 // pred_region
      %s26 = ssub.s32 16, 16
      %27 = vsyncadd [#allocation6], %s26
      %s29 = sshll.u32 %s1, 4
      %s30 = int_to_ptr.vmem [resolvable:$true] %s29
      %32 = dma.vmem_to_smem %s30, 16, [#allocation7], [#allocation6]
    $region9: #{tpu_custom_call.1} parent=1 // pred_fallthru
      _
    // Predicated region
    $region10: #{tpu_custom_call.1} parent=1 // pred_check
      _
    $region11: #{tpu_custom_call.1} parent=1 // pred_check_branch
      %34 = sbr.rel (0) target = $region13
    $region12: #{tpu_custom_call.1} parent=1 // pred_region
      %s36 = ssub.s32 16, 16
      %37 = vsyncadd [#allocation9], %s36
      %s39 = sshll.u32 %s2, 4
      %s40 = int_to_ptr.vmem [resolvable:$true] %s39
      %42 = dma.vmem_to_smem %s40, 16, [#allocation8], [#allocation9]
    $region13: #{tpu_custom_call.1} parent=1 // pred_fallthru
      _
    // Predicated region
    $region14: #{tpu_custom_call.1} parent=1 // pred_check
      _
    $region15: #{tpu_custom_call.1} parent=1 // pred_check_branch
      %44 = sbr.rel (0) target = $region17
    $region16: #{tpu_custom_call.1} parent=1 // pred_region
      _
    $region17: #{tpu_custom_call.1} parent=1 // pred_fallthru
      _
    // Predicated region
    $region18: #{tpu_custom_call.1} parent=1 // pred_check
      _
    $region19: #{tpu_custom_call.1} parent=1 // pred_check_branch
      %46 = sbr.rel (0) target = $region21
    $region20: #{tpu_custom_call.1} parent=1 // pred_region
      _
    $region21: #{tpu_custom_call.1} parent=1 // pred_fallthru
      _
    // Predicated region
    $region22: #{tpu_custom_call.1} parent=1 // pred_check
      _
    $region23: #{tpu_custom_call.1} parent=1 // pred_check_branch
      %48 = sbr.rel (0) target = $region25
    $region24: #{tpu_custom_call.1} parent=1 // pred_region
      %49 = dma.done [#allocation5], 64
    $region25: #{tpu_custom_call.1} parent=1 // pred_fallthru
      _
    // Predicated region
    $region26: #{tpu_custom_call.1} parent=1 // pred_check
      _
    $region27: #{tpu_custom_call.1} parent=1 // pred_check_branch
      %51 = sbr.rel (0) target = $region29
    $region28: #{tpu_custom_call.1} parent=1 // pred_region
      %52 = dma.done [#allocation6], 16
    $region29: #{tpu_custom_call.1} parent=1 // pred_fallthru
      _
    // Predicated region
    $region30: #{tpu_custom_call.1} parent=1 // pred_check
      _
    $region31: #{tpu_custom_call.1} parent=1 // pred_check_branch
      %54 = sbr.rel (0) target = $region33
    $region32: #{tpu_custom_call.1} parent=1 // pred_region
      %55 = dma.done [#allocation9], 16
    $region33: #{tpu_custom_call.1} parent=1 // pred_fallthru
      _
    %56 = sfence
    %v57 = vld [vmem:[%s4] sm:$0x1]
    %s58 = scalar_lea.vmem %s4, 1
    %v59 = vld [vmem:[%s58] sm:$0x1]
    %s60 = scalar_lea.vmem %s4, 2
    %v61 = vld [vmem:[%s60] sm:$0x1]
    %s62 = scalar_lea.vmem %s4, 3
    %v63 = vld [vmem:[%s62] sm:$0x1]
    %s64 = sld [smem:[#allocation3]]
    %v65 = vstv %s64
    %v66 = vmul.f32 %v57, %v65
    %s67 = sld [smem:[#allocation3 + $0x80]]
    %v68 = vstv %s67
    %v69 = vmul.f32 %v59, %v68
    %v70 = vadd.f32 %v66, %v69
    %s71 = sld [smem:[#allocation3 + $0x100]]
    %v72 = vstv %s71
    %v73 = vmul.f32 %v61, %v72
    %v74 = vadd.f32 %v70, %v73
    %s75 = sld [smem:[#allocation3 + $0x180]]
    %v76 = vstv %s75
    %v77 = vmul.f32 %v63, %v76
    %v78 = vadd.f32 %v74, %v77
    %s79 = sld [smem:[#allocation7]]
    %v80 = vstv %s79
    %v81 = vadd.f32 %v78, %v80
    %v82 = vmax.f32 %v81, 0.0
    %s83 = sld [smem:[#allocation8]]
    %v84 = vstv %s83
    %v85 = vmul.f32 %v82, %v84
    %s86 = sld [smem:[#allocation3 + $0x1]]
    %v87 = vstv %s86
    %v88 = vmul.f32 %v57, %v87
    %s89 = sld [smem:[#allocation3 + $0x81]]
    %v90 = vstv %s89
    %v91 = vmul.f32 %v59, %v90
    %v92 = vadd.f32 %v88, %v91
    %s93 = sld [smem:[#allocation3 + $0x101]]
    %v94 = vstv %s93
    %v95 = vmul.f32 %v61, %v94
    %v96 = vadd.f32 %v92, %v95
    %s97 = sld [smem:[#allocation3 + $0x181]]
    %v98 = vstv %s97
    %v99 = vmul.f32 %v63, %v98
    %v100 = vadd.f32 %v96, %v99
    %s101 = sld [smem:[#allocation7 + $0x1]]
    %v102 = vstv %s101
    %v103 = vadd.f32 %v100, %v102
    %v104 = vmax.f32 %v103, 0.0
    %s105 = sld [smem:[#allocation8 + $0x1]]
    %v106 = vstv %s105
    %v107 = vmul.f32 %v104, %v106
    %v108 = vadd.f32 %v85, %v107
    %s109 = sld [smem:[#allocation3 + $0x2]]
    %v110 = vstv %s109
    %v111 = vmul.f32 %v57, %v110
    %s112 = sld [smem:[#allocation3 + $0x82]]
    %v113 = vstv %s112
    %v114 = vmul.f32 %v59, %v113
    %v115 = vadd.f32 %v111, %v114
    %s116 = sld [smem:[#allocation3 + $0x102]]
    %v117 = vstv %s116
    %v118 = vmul.f32 %v61, %v117
    %v119 = vadd.f32 %v115, %v118
    %s120 = sld [smem:[#allocation3 + $0x182]]
    %v121 = vstv %s120
    %v122 = vmul.f32 %v63, %v121
    %v123 = vadd.f32 %v119, %v122
    %s124 = sld [smem:[#allocation7 + $0x2]]
    %v125 = vstv %s124
    %v126 = vadd.f32 %v123, %v125
    %v127 = vmax.f32 %v126, 0.0
    %s128 = sld [smem:[#allocation8 + $0x2]]
    %v129 = vstv %s128
    %v130 = vmul.f32 %v127, %v129
    %v131 = vadd.f32 %v108, %v130
    %s132 = sld [smem:[#allocation3 + $0x3]]
    %v133 = vstv %s132
    %v134 = vmul.f32 %v57, %v133
    %s135 = sld [smem:[#allocation3 + $0x83]]
    %v136 = vstv %s135
    %v137 = vmul.f32 %v59, %v136
    %v138 = vadd.f32 %v134, %v137
    %s139 = sld [smem:[#allocation3 + $0x103]]
    %v140 = vstv %s139
    %v141 = vmul.f32 %v61, %v140
    %v142 = vadd.f32 %v138, %v141
    %s143 = sld [smem:[#allocation3 + $0x183]]
    %v144 = vstv %s143
    %v145 = vmul.f32 %v63, %v144
    %v146 = vadd.f32 %v142, %v145
    %s147 = sld [smem:[#allocation7 + $0x3]]
    %v148 = vstv %s147
    %v149 = vadd.f32 %v146, %v148
    %v150 = vmax.f32 %v149, 0.0
    %s151 = sld [smem:[#allocation8 + $0x3]]
    %v152 = vstv %s151
    %v153 = vmul.f32 %v150, %v152
    %v154 = vadd.f32 %v131, %v153
    %s155 = sld [smem:[#allocation2]]
    %v156 = vstv %s155
    %v157 = vadd.f32 %v154, %v156
    %158 = vst [vmem:[#allocation10] sm:$0x1] %v157
    // Predicated region
    $region34: #{tpu_custom_call.1} parent=1 // pred_check
      _
    $region35: #{tpu_custom_call.1} parent=1 // pred_check_branch
      %160 = sbr.rel (0) target = $region37
    $region36: #{tpu_custom_call.1} parent=1 // pred_region
      %s162 = ssub.s32 16, 16
      %163 = vsyncadd [#allocation4], %s162
      %s165 = sshll.u32 [#allocation10], 4
      %s166 = int_to_ptr.vmem [resolvable:$true] %s165
      %168 = dma.vmem_to_hbm [thread:$0]  %s166, 16, %s5, [#allocation4]
    $region37: #{tpu_custom_call.1} parent=1 // pred_fallthru
      _
    // Predicated region
    $region38: #{tpu_custom_call.1} parent=1 // pred_check
      _
    $region39: #{tpu_custom_call.1} parent=1 // pred_check_branch
      %170 = sbr.rel (0) target = $region41
    $region40: #{tpu_custom_call.1} parent=1 // pred_region
      %171 = dma.done [#allocation4], 16
    $region41: #{tpu_custom_call.1} parent=1 // pred_fallthru
      _
    %172 = vsyncpa [#allocation4], 1
    %173 = vsyncpa [#allocation5], 1
    %174 = vsyncpa [#allocation6], 1
    %175 = vsyncpa [#allocation9], 1

</llo_original>
